<compile_context>
chip_gen: v7x
topology: tpu7x:2x2x1
jax: 0.10.0
libtpu: 0.0.40
codegen_flags: <defaults>
</compile_context>

<pallas_src>
import functools
import math

import jax
import jax.numpy as jnp
import numpy as np
from jax.experimental import pallas as pl
from jax.experimental.pallas import tpu as pltpu


def _round_up(x, m):
    return ((x + m - 1) // m) * m


def _vmem_capacity_bytes():
    """Per-core VMEM capacity; conservative fallback if the query fails."""
    try:
        info = pltpu.get_tpu_info()
        cap = getattr(info, "vmem_capacity_bytes", None)
        if cap:
            return int(cap)
    except Exception:
        pass
    return 64 * 1024 * 1024  # conservative default (v7x per-TensorCore)


def _auto_hw_tile(ic, oc, k2, halo, out_len, nsplit, ce, oe, vmem_limit):
    """Largest lane tile (multiple of 128 / 512) that fits the VMEM budget."""
    # Bytes that scale with hw_tile: x double-buffer (2*IC*ce), scaled-x temp
    # (IC*ce), f32 accumulator (OC*4), output double-buffer (2*OC*oe).
    per_elem = 3 * ic * ce + oc * (4 + 2 * oe)
    # Bytes that do not: halo part of the x buffers, the single-buffered bf16
    # weight block, plus margin for compiler-internal scratch.
    fixed = 3 * ic * halo * ce + k2 * oc * ic * ce + (4 << 20)
    avail = max(int(0.7 * (vmem_limit - fixed)), 1 << 20)
    t = min(avail // per_elem, 4096)
    t = min(t, _round_up(-(-out_len // nsplit), 128))
    if t >= 512:
        t = (t // 512) * 512          # keep the lane dim feeding both MXUs
    else:
        t = max((t // 128) * 128, 128)
    return int(t)


def _modconv_kernel(s_ref, scale_ref, w_ref, x_hbm, out_ref, xbuf, sem, *,
                    k, wp, hw_tile, tile_in, nt_inner, compute_dtype):
    """One (batch, spatial-split, inner-tile) grid step.

    NOTE: correctness of the manual x double-buffer relies on the innermost
    grid axis being iterated in order ("arbitrary").  The two outer axes may
    be sharded across cores ("parallel") because every (b, split) chunk
    re-primes its own DMA at inner tile 0 and scratch is per-core.
    """
    b = pl.program_id(0)
    p = pl.program_id(1)
    t = pl.program_id(2)
    tile_base = p * nt_inner

    def _fetch(g, slot):
        start = pl.multiple_of(g * hw_tile, 128)
        pltpu.make_async_copy(
            x_hbm.at[b, :, pl.ds(start, tile_in)],
            xbuf.at[slot], sem.at[slot]).start()

    # Prime the pipeline at the first inner tile of this (b, split) chunk.
    @pl.when(t == 0)
    def _():
        _fetch(tile_base, 0)

    slot = t & 1

    # Prefetch the next tile into the other slot while computing this one.
    @pl.when(t + 1 < nt_inner)
    def _():
        _fetch(tile_base + t + 1, 1 - slot)

    # Wait for the current tile (src argument only sets the transfer shape).
    pltpu.make_async_copy(
        x_hbm.at[b, :, pl.ds(0, tile_in)],
        xbuf.at[slot], sem.at[slot]).wait()

    # Style modulation as a per-input-channel scale on the activation tile.
    xs = (xbuf[slot] * s_ref[0]).astype(compute_dtype)          # (IC, tile_in)

    # K*K accumulating MXU dots over statically shifted lane slices.
    acc = jnp.dot(w_ref[0], xs[:, 0:hw_tile],
                  preferred_element_type=jnp.float32)           # (OC, hw_tile)
    for tap in range(1, k * k):
        off = (tap // k) * wp + (tap % k)                       # static offset
        acc = acc + jnp.dot(w_ref[tap], xs[:, off:off + hw_tile],
                            preferred_element_type=jnp.float32)

    # conv_scale * demod applied as a per-output-channel scale on the f32 acc.
    out_ref[...] = (acc * scale_ref[0])[None].astype(out_ref.dtype)


def modulated_conv2d(x, style, weight, mod_weight, mod_bias, *,
                     demodulate=True, hw_tile=None, spatial_splits=1,
                     compute_dtype=jnp.bfloat16, out_dtype=jnp.float32):
    """StyleGAN2 ModulatedConv2d forward (default branch, no up/down sample).

    x: (B, IC, H, W); style: (B, style_dim); weight: (1, OC, IC, K, K);
    mod_weight: (IC, style_dim); mod_bias: (IC,).
    Returns (B, OC, H, W) in `out_dtype` (pass bfloat16 on v5e to halve output
    HBM writes; accumulation is always f32).  `spatial_splits > 1` adds an
    extra parallel grid axis so both v7x TensorCores stay busy even at B=1.
    """
    B, IC, H, W = x.shape
    _, OC, IC_w, K, K_w = weight.shape
    assert IC_w == IC and K_w == K
    assert K % 2 == 1, "ModulatedConv2d 'same' padding assumes odd kernel size"
    style_dim = style.shape[1]
    K2 = K * K
    pad = K // 2
    Hp, Wp = H + 2 * pad, W + 2 * pad

    conv_scale = 1.0 / math.sqrt(IC * K * K)
    mod_scale = 1.0 / math.sqrt(style_dim)

    # TODO(synk): for layers with OC/IC well below the MXU tile (128/256) the
    #             systolic array is mostly idle — dispatch those layers to a
    #             plain XLA conv instead of this kernel.
    # NOTE: the 2*pad junk columns per row (~12% extra work at W=16, <2% at
    #       W>=128) are computed and sliced off; 2-D row tiling would recover
    #       them at small resolutions (low priority).

    ce = jnp.dtype(compute_dtype).itemsize
    oe = jnp.dtype(out_dtype).itemsize

    # ---- per-generation tile / VMEM sizing --------------------------------
    vmem_cap = _vmem_capacity_bytes()
    vmem_limit = max(min(int(0.75 * vmem_cap), 100 * 1024 * 1024),
                     32 * 1024 * 1024)

    out_len = H * Wp                  # padded-width row-major output positions
    halo = (K - 1) * Wp + (K - 1)     # trailing elements a tile needs
    nsplit = max(1, int(spatial_splits))
    if hw_tile is None:
        hw_tile = _auto_hw_tile(IC, OC, K2, halo, out_len, nsplit, ce, oe,
                                vmem_limit)
    assert hw_tile % 128 == 0, "hw_tile must be a multiple of 128"

    nt_needed = -(-out_len // hw_tile)
    nt_inner = -(-nt_needed // nsplit)
    nt_total = nt_inner * nsplit
    out_pad_len = nt_total * hw_tile
    tile_in = _round_up(hw_tile + halo, 128)        # lane-aligned input window
    x_pad_len = (nt_total - 1) * hw_tile + tile_in

    # ---- XLA-side glue (all tiny except one pad/flatten pass over x) ------
    f32 = jnp.float32
    s = style.astype(f32) @ (mod_weight.astype(f32).T * mod_scale)
    s = s + mod_bias.astype(f32)[None, :]                        # (B, IC)

    w_f32 = weight[0].astype(f32)                                # (OC, IC, K, K)
    if demodulate:
        # Exact factorization: sum over (ic,k) of (conv_scale*W*s)^2
        #   = conv_scale^2 * sum_ic s^2 * sum_k W^2  →  a (B,IC)@(IC,OC) matmul.
        w_sq = jnp.sum(w_f32 * w_f32, axis=(2, 3))               # (OC, IC)
        sum_sq = (s * s) @ w_sq.T                                # (B, OC)
        demod = jax.lax.rsqrt(conv_scale * conv_scale * sum_sq + 1e-8)
        scale_out = conv_scale * demod                           # (B, OC)
    else:
        scale_out = jnp.full((B, OC), conv_scale, f32)

    s_in = s.reshape(B, IC, 1)
    scale_in = scale_out.reshape(B, OC, 1)

    # Batch-independent conv weight, tap-major: (K2, OC, IC) bf16.
    w_taps = jnp.transpose(w_f32, (2, 3, 0, 1)).reshape(K2, OC, IC)
    w_taps = w_taps.astype(compute_dtype)

    # Zero-pad + flatten the activation once (single XLA pass); the kernel
    # DMAs overlapping (IC, tile_in) windows straight out of this HBM array.
    x_pad = jnp.pad(x.astype(compute_dtype),
                    ((0, 0), (0, 0), (pad, pad), (pad, pad)))
    x_flat = x_pad.reshape(B, IC, Hp * Wp)
    x_flat = jnp.pad(x_flat, ((0, 0), (0, 0), (0, x_pad_len - Hp * Wp)))

    kernel = functools.partial(
        _modconv_kernel, k=K, wp=Wp, hw_tile=hw_tile, tile_in=tile_in,
        nt_inner=nt_inner, compute_dtype=compute_dtype)

    cost = pl.CostEstimate(
        flops=2 * B * OC * K2 * IC * out_pad_len,
        transcendentals=0,
        bytes_accessed=(B * nt_total * IC * tile_in * ce         # activations
                        + K2 * OC * IC * ce                      # weight taps
                        + B * (IC + OC) * 4                      # s / scale
                        + B * OC * out_pad_len * oe))            # output

    out_flat = pl.pallas_call(
        kernel,
        out_shape=jax.ShapeDtypeStruct((B, OC, out_pad_len), out_dtype),
        grid_spec=pltpu.PrefetchScalarGridSpec(
            num_scalar_prefetch=0,
            grid=(B, nsplit, nt_inner),
            in_specs=[
                pl.BlockSpec((1, IC, 1), lambda b, p, t: (b, 0, 0)),   # s
                pl.BlockSpec((1, OC, 1), lambda b, p, t: (b, 0, 0)),   # scale
                pl.BlockSpec((K2, OC, IC), lambda b, p, t: (0, 0, 0),
                             pipeline_mode=pl.Buffered(1)),            # W taps
                pl.BlockSpec(memory_space=pl.ANY),                     # x (HBM)
            ],
            out_specs=pl.BlockSpec(
                (1, OC, hw_tile), lambda b, p, t: (b, 0, p * nt_inner + t)),
            scratch_shapes=[
                pltpu.VMEM((2, IC, tile_in), compute_dtype),  # x double buffer
                pltpu.SemaphoreType.DMA((2,)),
            ],
        ),
        compiler_params=pltpu.CompilerParams(
            # The innermost axis must stay "arbitrary": the manual x
            # double-buffer carries state across inner tiles of a chunk.
            dimension_semantics=("parallel", "parallel", "arbitrary"),
            vmem_limit_bytes=vmem_limit),
        cost_estimate=cost,
    )(s_in, scale_in, w_taps, x_flat)

    # Drop the padded tail and the junk pad columns, restore NCHW.
    out = out_flat[:, :, :out_len].reshape(B, OC, H, Wp)[:, :, :, :W]
    return out


def _reference(x, style, weight, mod_weight, mod_bias, *, demodulate=True):
    """Pure-JAX f32 reference mirroring the PyTorch forward (default branch)."""
    B, IC, H, W = x.shape
    _, OC, _, K, _ = weight.shape
    style_dim = style.shape[1]
    conv_scale = 1.0 / math.sqrt(IC * K * K)
    mod_scale = 1.0 / math.sqrt(style_dim)

    s = style @ (mod_weight * mod_scale).T + mod_bias            # (B, IC)
    w = conv_scale * weight * s[:, None, :, None, None]          # (B,OC,IC,K,K)
    if demodulate:
        demod = jax.lax.rsqrt(jnp.sum(w ** 2, axis=(2, 3, 4)) + 1e-8)
        w = w * demod[:, :, None, None, None]

    outs = []
    for b in range(B):
        o = jax.lax.conv_general_dilated(
            x[b:b + 1], w[b], window_strides=(1, 1),
            padding=[(K // 2, K // 2), (K // 2, K // 2)],
            dimension_numbers=("NCHW", "OIHW", "NCHW"))
        outs.append(o)
    return jnp.concatenate(outs, axis=0)


if __name__ == "__main__":
    # ModulatedConv2d(in_channel=4, out_channel=8, kernel_size=3,
    #                 style_dim=32, demodulate=True) at a small test size.
    B, IC, OC, K, STYLE_DIM, H, W = 2, 4, 8, 3, 32, 16, 16

    key = jax.random.PRNGKey(0)
    k1, k2, k3, k4 = jax.random.split(key, 4)

    weight = jax.random.normal(k1, (1, OC, IC, K, K), jnp.float32)
    mod_weight = jax.random.normal(k2, (IC, STYLE_DIM), jnp.float32)  # lr_mul=1
    mod_bias = jnp.ones((IC,), jnp.float32)                           # bias_init=1

    x = jax.random.normal(k3, (B, IC, H, W), jnp.float32)
    style = jax.random.normal(k4, (B, STYLE_DIM), jnp.float32)

    ref = jax.block_until_ready(
        _reference(x, style, weight, mod_weight, mod_bias, demodulate=True))
    ref_nd = jax.block_until_ready(
        _reference(x, style, weight, mod_weight, mod_bias, demodulate=False))

    # 1) Multi-tile path: exercises the in-kernel x double-buffer prefetch.
    f1 = jax.jit(functools.partial(modulated_conv2d, demodulate=True,
                                   hw_tile=256))
    out1 = jax.block_until_ready(f1(x, style, weight, mod_weight, mod_bias))
    assert out1.shape == (B, OC, H, W)
    np.testing.assert_allclose(np.asarray(out1), np.asarray(ref),
                               rtol=3e-2, atol=3e-2)

    # 2) Spatial-split path (grid=(B,2,nt)): keeps both v7x TCs busy at B=1.
    f2 = jax.jit(functools.partial(modulated_conv2d, demodulate=True,
                                   hw_tile=128, spatial_splits=2))
    out2 = jax.block_until_ready(f2(x, style, weight, mod_weight, mod_bias))
    np.testing.assert_allclose(np.asarray(out2), np.asarray(ref),
                               rtol=3e-2, atol=3e-2)

    # 3) Auto tile sizing (per-generation VMEM budget) + demodulate=False.
    f3 = jax.jit(functools.partial(modulated_conv2d, demodulate=False))
    out3 = jax.block_until_ready(f3(x, style, weight, mod_weight, mod_bias))
    np.testing.assert_allclose(np.asarray(out3), np.asarray(ref_nd),
                               rtol=3e-2, atol=3e-2)

    print("KERNEL_OK")
</pallas_src>

<mosaic_0001>
module attributes {stable_mosaic.version = 11 : i64} {
  func.func @_modconv_kernel(%arg0: i32, %arg1: i32, %arg2: i32, %arg3: memref<1x4x1xf32, #tpu.memory_space<vmem>>, %arg4: memref<1x8x1xf32, #tpu.memory_space<vmem>>, %arg5: memref<9x8x4xbf16, #tpu.memory_space<vmem>>, %arg6: memref<2x4x640xbf16, #tpu.memory_space<any>>, %arg7: memref<1x8x256xf32, #tpu.memory_space<vmem>>, %arg8: memref<2x4x384xbf16, #tpu.memory_space<vmem>>, %arg9: memref<2x!tpu.dma_semaphore, #tpu.memory_space<semaphore_mem>>) attributes {dimension_semantics = [#tpu.dimension_semantics<parallel>, #tpu.dimension_semantics<parallel>, #tpu.dimension_semantics<arbitrary>], iteration_bounds = array<i64: 2, 1, 2>, scalar_prefetch = 0 : i64, scratch_operands = 2 : i64, tpu.core_type = #tpu.core_type<tc>, window_params = [{transform_indices = @transform_0, window_bounds = array<i64: 1, 4, 1>}, {transform_indices = @transform_1, window_bounds = array<i64: 1, 8, 1>}, {pipeline_mode = #tpu.pipeline_mode<synchronous>, transform_indices = @transform_2, window_bounds = array<i64: 9, 8, 4>}, {}, {transform_indices = @transform_4, window_bounds = array<i64: 1, 8, 256>}]} {
    %c2_i32 = arith.constant 2 : i32
    %0 = arith.muli %arg1, %c2_i32 : i32
    %c0_i32 = arith.constant 0 : i32
    %1 = arith.cmpi eq, %arg2, %c0_i32 : i32
    %2 = arith.extui %1 : i1 to i32
    %c0_i32_0 = arith.constant 0 : i32
    %3 = arith.cmpi ne, %2, %c0_i32_0 : i32
    scf.if %3 {
      %c256_i32 = arith.constant 256 : i32
      %74 = arith.muli %0, %c256_i32 : i32
      %75 = tpu.assume_multiple %74, 128 : i32
      %c0_i32_45 = arith.constant 0 : i32
      %c0_i32_46 = arith.constant 0 : i32
      %c0_i32_47 = arith.constant 0 : i32
      %76 = tpu.memref_slice %arg6[%arg0, %c0_i32_47, %75] : memref<2x4x640xbf16, #tpu.memory_space<any>> -> memref<1x4x384xbf16, #tpu.memory_space<any>>
      %77 = tpu.memref_squeeze %76 : memref<1x4x384xbf16, #tpu.memory_space<any>> -> memref<4x384xbf16, #tpu.memory_space<any>>
      %c0_i32_48 = arith.constant 0 : i32
      %c0_i32_49 = arith.constant 0 : i32
      %78 = tpu.memref_slice %arg8[%c0_i32_45, %c0_i32_48, %c0_i32_49] : memref<2x4x384xbf16, #tpu.memory_space<vmem>> -> memref<1x4x384xbf16, #tpu.memory_space<vmem>>
      %79 = tpu.memref_squeeze %78 : memref<1x4x384xbf16, #tpu.memory_space<vmem>> -> memref<4x384xbf16, #tpu.memory_space<vmem>>
      %80 = tpu.memref_slice %arg9[%c0_i32_46] : memref<2x!tpu.dma_semaphore, #tpu.memory_space<semaphore_mem>> -> memref<1x!tpu.dma_semaphore, #tpu.memory_space<semaphore_mem>>
      %81 = tpu.memref_squeeze %80 : memref<1x!tpu.dma_semaphore, #tpu.memory_space<semaphore_mem>> -> memref<!tpu.dma_semaphore, #tpu.memory_space<semaphore_mem>>
      tpu.enqueue_dma source(%77 : memref<4x384xbf16, #tpu.memory_space<any>>) target(%79 : memref<4x384xbf16, #tpu.memory_space<vmem>>) target_semaphore(%81 : memref<!tpu.dma_semaphore, #tpu.memory_space<semaphore_mem>>)
    } else {
    }
    %c1_i32 = arith.constant 1 : i32
    %4 = arith.andi %arg2, %c1_i32 : i32
    %c1_i32_1 = arith.constant 1 : i32
    %5 = arith.addi %arg2, %c1_i32_1 : i32
    %c2_i32_2 = arith.constant 2 : i32
    %6 = arith.cmpi slt, %5, %c2_i32_2 : i32
    %7 = arith.extui %6 : i1 to i32
    %c0_i32_3 = arith.constant 0 : i32
    %8 = arith.cmpi ne, %7, %c0_i32_3 : i32
    scf.if %8 {
      %74 = arith.addi %0, %arg2 : i32
      %c1_i32_45 = arith.constant 1 : i32
      %75 = arith.addi %74, %c1_i32_45 : i32
      %c1_i32_46 = arith.constant 1 : i32
      %76 = arith.subi %c1_i32_46, %4 : i32
      %c256_i32 = arith.constant 256 : i32
      %77 = arith.muli %75, %c256_i32 : i32
      %78 = tpu.assume_multiple %77, 128 : i32
      %c0_i32_47 = arith.constant 0 : i32
      %79 = tpu.memref_slice %arg6[%arg0, %c0_i32_47, %78] : memref<2x4x640xbf16, #tpu.memory_space<any>> -> memref<1x4x384xbf16, #tpu.memory_space<any>>
      %80 = tpu.memref_squeeze %79 : memref<1x4x384xbf16, #tpu.memory_space<any>> -> memref<4x384xbf16, #tpu.memory_space<any>>
      %c0_i32_48 = arith.constant 0 : i32
      %c0_i32_49 = arith.constant 0 : i32
      %81 = tpu.memref_slice %arg8[%76, %c0_i32_48, %c0_i32_49] : memref<2x4x384xbf16, #tpu.memory_space<vmem>> -> memref<1x4x384xbf16, #tpu.memory_space<vmem>>
      %82 = tpu.memref_squeeze %81 : memref<1x4x384xbf16, #tpu.memory_space<vmem>> -> memref<4x384xbf16, #tpu.memory_space<vmem>>
      %83 = tpu.memref_slice %arg9[%76] : memref<2x!tpu.dma_semaphore, #tpu.memory_space<semaphore_mem>> -> memref<1x!tpu.dma_semaphore, #tpu.memory_space<semaphore_mem>>
      %84 = tpu.memref_squeeze %83 : memref<1x!tpu.dma_semaphore, #tpu.memory_space<semaphore_mem>> -> memref<!tpu.dma_semaphore, #tpu.memory_space<semaphore_mem>>
      tpu.enqueue_dma source(%80 : memref<4x384xbf16, #tpu.memory_space<any>>) target(%82 : memref<4x384xbf16, #tpu.memory_space<vmem>>) target_semaphore(%84 : memref<!tpu.dma_semaphore, #tpu.memory_space<semaphore_mem>>)
    } else {
    }
    %c0_i32_4 = arith.constant 0 : i32
    %c0_i32_5 = arith.constant 0 : i32
    %9 = tpu.memref_slice %arg6[%arg0, %c0_i32_4, %c0_i32_5] : memref<2x4x640xbf16, #tpu.memory_space<any>> -> memref<1x4x384xbf16, #tpu.memory_space<any>>
    %10 = tpu.memref_squeeze %9 : memref<1x4x384xbf16, #tpu.memory_space<any>> -> memref<4x384xbf16, #tpu.memory_space<any>>
    %c0_i32_6 = arith.constant 0 : i32
    %c0_i32_7 = arith.constant 0 : i32
    %11 = tpu.memref_slice %arg8[%4, %c0_i32_6, %c0_i32_7] : memref<2x4x384xbf16, #tpu.memory_space<vmem>> -> memref<1x4x384xbf16, #tpu.memory_space<vmem>>
    %12 = tpu.memref_squeeze %11 : memref<1x4x384xbf16, #tpu.memory_space<vmem>> -> memref<4x384xbf16, #tpu.memory_space<vmem>>
    %13 = tpu.memref_slice %arg9[%4] : memref<2x!tpu.dma_semaphore, #tpu.memory_space<semaphore_mem>> -> memref<1x!tpu.dma_semaphore, #tpu.memory_space<semaphore_mem>>
    %14 = tpu.memref_squeeze %13 : memref<1x!tpu.dma_semaphore, #tpu.memory_space<semaphore_mem>> -> memref<!tpu.dma_semaphore, #tpu.memory_space<semaphore_mem>>
    tpu.wait_dma2 semaphore(%14 : memref<!tpu.dma_semaphore, #tpu.memory_space<semaphore_mem>>) src(%10 : memref<4x384xbf16, #tpu.memory_space<any>>) dst(%12 : memref<4x384xbf16, #tpu.memory_space<vmem>>)
    %15 = arith.index_cast %4 : i32 to index
    %c0 = arith.constant 0 : index
    %c0_8 = arith.constant 0 : index
    %16 = vector.load %arg8[%15, %c0, %c0_8] : memref<2x4x384xbf16, #tpu.memory_space<vmem>>, vector<1x4x384xbf16>
    %17 = vector.shape_cast %16 : vector<1x4x384xbf16> to vector<4x384xbf16>
    %c0_9 = arith.constant 0 : index
    %c0_10 = arith.constant 0 : index
    %c0_11 = arith.constant 0 : index
    %18 = vector.load %arg3[%c0_9, %c0_10, %c0_11] : memref<1x4x1xf32, #tpu.memory_space<vmem>>, vector<1x4x1xf32>
    %19 = vector.shape_cast %18 : vector<1x4x1xf32> to vector<4x1xf32>
    %20 = arith.extf %17 : vector<4x384xbf16> to vector<4x384xf32>
    %21 = vector.broadcast %19 : vector<4x1xf32> to vector<4x384xf32>
    %22 = arith.mulf %20, %21 : vector<4x384xf32>
    %23 = arith.truncf %22 : vector<4x384xf32> to vector<4x384xbf16>
    %c0_12 = arith.constant 0 : index
    %c0_13 = arith.constant 0 : index
    %c0_14 = arith.constant 0 : index
    %24 = vector.load %arg5[%c0_12, %c0_13, %c0_14] : memref<9x8x4xbf16, #tpu.memory_space<vmem>>, vector<1x8x4xbf16>
    %25 = vector.shape_cast %24 : vector<1x8x4xbf16> to vector<8x4xbf16>
    %26 = vector.extract_strided_slice %23 {offsets = [0, 0], sizes = [4, 256], strides = [1, 1]} : vector<4x384xbf16> to vector<4x256xbf16>
    %cst = arith.constant dense<0.000000e+00> : vector<8x256xf32>
    %27 = tpu.matmul %25, %26, %cst {dimension_numbers = #tpu.dot_dimension_numbers<[1], [0], [0], [1], [0, 0, 1, 1], [], []>} : vector<8x4xbf16>, vector<4x256xbf16>, vector<8x256xf32> -> vector<8x256xf32>
    %c1 = arith.constant 1 : index
    %c0_15 = arith.constant 0 : index
    %c0_16 = arith.constant 0 : index
    %28 = vector.load %arg5[%c1, %c0_15, %c0_16] : memref<9x8x4xbf16, #tpu.memory_space<vmem>>, vector<1x8x4xbf16>
    %29 = vector.shape_cast %28 : vector<1x8x4xbf16> to vector<8x4xbf16>
    %30 = vector.extract_strided_slice %23 {offsets = [0, 1], sizes = [4, 256], strides = [1, 1]} : vector<4x384xbf16> to vector<4x256xbf16>
    %cst_17 = arith.constant dense<0.000000e+00> : vector<8x256xf32>
    %31 = tpu.matmul %29, %30, %cst_17 {dimension_numbers = #tpu.dot_dimension_numbers<[1], [0], [0], [1], [0, 0, 1, 1], [], []>} : vector<8x4xbf16>, vector<4x256xbf16>, vector<8x256xf32> -> vector<8x256xf32>
    %32 = arith.addf %27, %31 : vector<8x256xf32>
    %c2 = arith.constant 2 : index
    %c0_18 = arith.constant 0 : index
    %c0_19 = arith.constant 0 : index
    %33 = vector.load %arg5[%c2, %c0_18, %c0_19] : memref<9x8x4xbf16, #tpu.memory_space<vmem>>, vector<1x8x4xbf16>
    %34 = vector.shape_cast %33 : vector<1x8x4xbf16> to vector<8x4xbf16>
    %35 = vector.extract_strided_slice %23 {offsets = [0, 2], sizes = [4, 256], strides = [1, 1]} : vector<4x384xbf16> to vector<4x256xbf16>
    %cst_20 = arith.constant dense<0.000000e+00> : vector<8x256xf32>
    %36 = tpu.matmul %34, %35, %cst_20 {dimension_numbers = #tpu.dot_dimension_numbers<[1], [0], [0], [1], [0, 0, 1, 1], [], []>} : vector<8x4xbf16>, vector<4x256xbf16>, vector<8x256xf32> -> vector<8x256xf32>
    %37 = arith.addf %32, %36 : vector<8x256xf32>
    %c3 = arith.constant 3 : index
    %c0_21 = arith.constant 0 : index
    %c0_22 = arith.constant 0 : index
    %38 = vector.load %arg5[%c3, %c0_21, %c0_22] : memref<9x8x4xbf16, #tpu.memory_space<vmem>>, vector<1x8x4xbf16>
    %39 = vector.shape_cast %38 : vector<1x8x4xbf16> to vector<8x4xbf16>
    %40 = vector.extract_strided_slice %23 {offsets = [0, 18], sizes = [4, 256], strides = [1, 1]} : vector<4x384xbf16> to vector<4x256xbf16>
    %cst_23 = arith.constant dense<0.000000e+00> : vector<8x256xf32>
    %41 = tpu.matmul %39, %40, %cst_23 {dimension_numbers = #tpu.dot_dimension_numbers<[1], [0], [0], [1], [0, 0, 1, 1], [], []>} : vector<8x4xbf16>, vector<4x256xbf16>, vector<8x256xf32> -> vector<8x256xf32>
    %42 = arith.addf %37, %41 : vector<8x256xf32>
    %c4 = arith.constant 4 : index
    %c0_24 = arith.constant 0 : index
    %c0_25 = arith.constant 0 : index
    %43 = vector.load %arg5[%c4, %c0_24, %c0_25] : memref<9x8x4xbf16, #tpu.memory_space<vmem>>, vector<1x8x4xbf16>
    %44 = vector.shape_cast %43 : vector<1x8x4xbf16> to vector<8x4xbf16>
    %45 = vector.extract_strided_slice %23 {offsets = [0, 19], sizes = [4, 256], strides = [1, 1]} : vector<4x384xbf16> to vector<4x256xbf16>
    %cst_26 = arith.constant dense<0.000000e+00> : vector<8x256xf32>
    %46 = tpu.matmul %44, %45, %cst_26 {dimension_numbers = #tpu.dot_dimension_numbers<[1], [0], [0], [1], [0, 0, 1, 1], [], []>} : vector<8x4xbf16>, vector<4x256xbf16>, vector<8x256xf32> -> vector<8x256xf32>
    %47 = arith.addf %42, %46 : vector<8x256xf32>
    %c5 = arith.constant 5 : index
    %c0_27 = arith.constant 0 : index
    %c0_28 = arith.constant 0 : index
    %48 = vector.load %arg5[%c5, %c0_27, %c0_28] : memref<9x8x4xbf16, #tpu.memory_space<vmem>>, vector<1x8x4xbf16>
    %49 = vector.shape_cast %48 : vector<1x8x4xbf16> to vector<8x4xbf16>
    %50 = vector.extract_strided_slice %23 {offsets = [0, 20], sizes = [4, 256], strides = [1, 1]} : vector<4x384xbf16> to vector<4x256xbf16>
    %cst_29 = arith.constant dense<0.000000e+00> : vector<8x256xf32>
    %51 = tpu.matmul %49, %50, %cst_29 {dimension_numbers = #tpu.dot_dimension_numbers<[1], [0], [0], [1], [0, 0, 1, 1], [], []>} : vector<8x4xbf16>, vector<4x256xbf16>, vector<8x256xf32> -> vector<8x256xf32>
    %52 = arith.addf %47, %51 : vector<8x256xf32>
    %c6 = arith.constant 6 : index
    %c0_30 = arith.constant 0 : index
    %c0_31 = arith.constant 0 : index
    %53 = vector.load %arg5[%c6, %c0_30, %c0_31] : memref<9x8x4xbf16, #tpu.memory_space<vmem>>, vector<1x8x4xbf16>
    %54 = vector.shape_cast %53 : vector<1x8x4xbf16> to vector<8x4xbf16>
    %55 = vector.extract_strided_slice %23 {offsets = [0, 36], sizes = [4, 256], strides = [1, 1]} : vector<4x384xbf16> to vector<4x256xbf16>
    %cst_32 = arith.constant dense<0.000000e+00> : vector<8x256xf32>
    %56 = tpu.matmul %54, %55, %cst_32 {dimension_numbers = #tpu.dot_dimension_numbers<[1], [0], [0], [1], [0, 0, 1, 1], [], []>} : vector<8x4xbf16>, vector<4x256xbf16>, vector<8x256xf32> -> vector<8x256xf32>
    %57 = arith.addf %52, %56 : vector<8x256xf32>
    %c7 = arith.constant 7 : index
    %c0_33 = arith.constant 0 : index
    %c0_34 = arith.constant 0 : index
    %58 = vector.load %arg5[%c7, %c0_33, %c0_34] : memref<9x8x4xbf16, #tpu.memory_space<vmem>>, vector<1x8x4xbf16>
    %59 = vector.shape_cast %58 : vector<1x8x4xbf16> to vector<8x4xbf16>
    %60 = vector.extract_strided_slice %23 {offsets = [0, 37], sizes = [4, 256], strides = [1, 1]} : vector<4x384xbf16> to vector<4x256xbf16>
    %cst_35 = arith.constant dense<0.000000e+00> : vector<8x256xf32>
    %61 = tpu.matmul %59, %60, %cst_35 {dimension_numbers = #tpu.dot_dimension_numbers<[1], [0], [0], [1], [0, 0, 1, 1], [], []>} : vector<8x4xbf16>, vector<4x256xbf16>, vector<8x256xf32> -> vector<8x256xf32>
    %62 = arith.addf %57, %61 : vector<8x256xf32>
    %c8 = arith.constant 8 : index
    %c0_36 = arith.constant 0 : index
    %c0_37 = arith.constant 0 : index
    %63 = vector.load %arg5[%c8, %c0_36, %c0_37] : memref<9x8x4xbf16, #tpu.memory_space<vmem>>, vector<1x8x4xbf16>
    %64 = vector.shape_cast %63 : vector<1x8x4xbf16> to vector<8x4xbf16>
    %65 = vector.extract_strided_slice %23 {offsets = [0, 38], sizes = [4, 256], strides = [1, 1]} : vector<4x384xbf16> to vector<4x256xbf16>
    %cst_38 = arith.constant dense<0.000000e+00> : vector<8x256xf32>
    %66 = tpu.matmul %64, %65, %cst_38 {dimension_numbers = #tpu.dot_dimension_numbers<[1], [0], [0], [1], [0, 0, 1, 1], [], []>} : vector<8x4xbf16>, vector<4x256xbf16>, vector<8x256xf32> -> vector<8x256xf32>
    %67 = arith.addf %62, %66 : vector<8x256xf32>
    %c0_39 = arith.constant 0 : index
    %c0_40 = arith.constant 0 : index
    %c0_41 = arith.constant 0 : index
    %68 = vector.load %arg4[%c0_39, %c0_40, %c0_41] : memref<1x8x1xf32, #tpu.memory_space<vmem>>, vector<1x8x1xf32>
    %69 = vector.shape_cast %68 : vector<1x8x1xf32> to vector<8x1xf32>
    %70 = vector.broadcast %69 : vector<8x1xf32> to vector<8x256xf32>
    %71 = arith.mulf %67, %70 : vector<8x256xf32>
    %72 = vector.shape_cast %71 : vector<8x256xf32> to vector<1x8x256xf32>
    %c0_42 = arith.constant 0 : index
    %c0_43 = arith.constant 0 : index
    %c0_44 = arith.constant 0 : index
    %73 = vector.load %arg7[%c0_42, %c0_43, %c0_44] : memref<1x8x256xf32, #tpu.memory_space<vmem>>, vector<1x8x256xf32>
    tpu.vector_store %arg7[%c0_42, %c0_43, %c0_44], %72 {strides = array<i32>} : memref<1x8x256xf32, #tpu.memory_space<vmem>>, vector<1x8x256xf32>,
    return
  }
  func.func @transform_0(%arg0: i32, %arg1: i32, %arg2: i32) -> (i32, i32, i32) {
    %c0_i32 = arith.constant 0 : i32
    %c0_i32_0 = arith.constant 0 : i32
    %c0_i32_1 = arith.constant 0 : i32
    return %arg0, %c0_i32, %c0_i32_0 : i32, i32, i32
  }
  func.func @transform_1(%arg0: i32, %arg1: i32, %arg2: i32) -> (i32, i32, i32) {
    %c0_i32 = arith.constant 0 : i32
    %c0_i32_0 = arith.constant 0 : i32
    %c0_i32_1 = arith.constant 0 : i32
    return %arg0, %c0_i32, %c0_i32_0 : i32, i32, i32
  }
  func.func @transform_2(%arg0: i32, %arg1: i32, %arg2: i32) -> (i32, i32, i32) {
    %c0_i32 = arith.constant 0 : i32
    %c0_i32_0 = arith.constant 0 : i32
    %c0_i32_1 = arith.constant 0 : i32
    %c0_i32_2 = arith.constant 0 : i32
    return %c0_i32, %c0_i32_0, %c0_i32_1 : i32, i32, i32
  }
  func.func @transform_4(%arg0: i32, %arg1: i32, %arg2: i32) -> (i32, i32, i32) {
    %c2_i32 = arith.constant 2 : i32
    %0 = arith.muli %arg1, %c2_i32 : i32
    %1 = arith.addi %0, %arg2 : i32
    %c0_i32 = arith.constant 0 : i32
    %c0_i32_0 = arith.constant 0 : i32
    return %arg0, %c0_i32, %1 : i32, i32, i32
  }
}

</mosaic_0001>

<llo_original>
// kernel: modulated_conv2d.1
$region0: #{modulated_conv2d.1}
  #allocation0 [shape = 'u32[]', space=smem, size = 0x4, offset = 0x4, fixed_abs, tag = 'smem constant byte address 0x4 - core index']
  #allocation1 [shape = 'u32[144,128]{1,0:T(1,128)}', space=vmem, size = 0x12000, scoped, tag = 'internal scratch']
  #allocation2 [shape = 'bf16[2,4,384]{2,1,0:T(4,128)(2,1)}', space=vmem, size = 0x1800, scoped, tag = 'scratch operand']
  #allocation3 [shape = 's32[2]{0}', space=sflag, size = 0x8, scoped, tag = 'scratch operand']
  #allocation4 [shape = 's32[]', space=sflag, size = 0x4, offset = 0, fixed_abs, tag = 'sflag constant byte address 0x0 - dummy sync flag']
  #allocation5 [shape = 's32[]', space=sflag, size = 0x4, offset = 0, fixed_abs, tag = 'sflag constant byte address 0x0 - dummy sync flag']
  %s0 = inlined_call_operand.vmem [shape: f32[2,4,1], index: 0, kind: input, shape index: {}]
  %s1 = inlined_call_operand.vmem [shape: f32[2,8,1], index: 1, kind: input, shape index: {}]
  %s2 = inlined_call_operand.vmem [shape: bf16[9,8,4], index: 2, kind: input, shape index: {}]
  %s3 = inlined_call_operand.vmem [shape: bf16[2,4,640], index: 3, kind: input, shape index: {}]
  %s4 = inlined_call_operand.vmem [shape: f32[2,8,512], index: 4, kind: output, shape index: {}]
  %s5 = sld [smem:[#allocation0]]
  $region113: #{modulated_conv2d.1} parent=0
    _
  %s7 = ssub.s32 1, %s5
  %s8 = scalar_select 0, %s7, %s5
  loop: start=0, step=1, limit=6
  $region2: #{modulated_conv2d.1} parent=0 // loop_pre_header
    _
  $region3: #{modulated_conv2d.1} parent=0 // loop_header
    %s10 = sphi 0, %s14
    %p11 = scmp.ge.s32.totalorder %s10, 6
    %s17 = sphi 0, %s36
    %s18 = sphi 0, %s32
    %s19 = sphi 0, %s28
    %s20 = sphi 0, %s17
    %s21 = sphi 0, %s18
    %s22 = sphi 0, %s19
    %s23 = sphi 0, %s20
    %s24 = sphi 0, %s21
    %s25 = sphi 0, %s22
    %s39 = sphi 0, %s41
    %s42 = sphi 0, %s39
    %s43 = sphi 0, %s42
    %s59 = sphi 0, %s43
    %s65 = sphi 0, %s67
    %s68 = sphi 0, %s65
    %s69 = sphi 0, %s68
    %s85 = sphi 0, %s69
    %s89 = sphi 0, %s89
    %s91 = sphi 0, %s89
    %s92 = sphi 0, %s91
    %s106 = sphi 0, %s92
    %s118 = sphi 0, %s120
    %s121 = sphi 0, %s118
    %s122 = sphi 0, %s121
    %s138 = sphi 0, %s122
  $region4: #{modulated_conv2d.1} parent=0 // loop_header_branch
    %13 = sbr.rel (%p11) target = $region8
  $region5: #{modulated_conv2d.1} parent=0 // loop_body
    %s15 = ssub.s32 %s10, 1
    %s16 = ssub.s32 %s10, 2
    %s26 = sadd.s32 1, %s19
    %p27 = scmp.ge.s32.totalorder %s26, 2
    %s28 = scalar_select %p27, 0, %s26
    %s29 = sadd.s32 1, %s18
    %s30 = scalar_select %p27, %s29, %s18
    %p31 = scmp.ge.s32.totalorder %s30, 1
    %s32 = scalar_select %p31, 0, %s30
    %s33 = sadd.s32 1, %s17
    %s34 = scalar_select %p31, %s33, %s17
    %p35 = scmp.ge.s32.totalorder %s34, 2
    %s36 = scalar_select %p35, 0, %s34
    %s37 = ssub.s32 %s17, %s36
    %p38 = scmp.eq.s32.totalorder %s37, 0
    %s40 = sadd.s32 %s39, 1
    %s41 = scalar_select %p38, %s39, %s40
    %p44 = pneg %p38
    %p45 = scmp.eq.s32.totalorder %s10, 3
    %p46 = por %p44, %p45
    %p47 = scmp.ne.s32.totalorder %s39, %s42
    %p48 = scmp.eq.s32.totalorder %s10, 0
    %p49 = por %p47, %p48
    %p50 = scmp.ne.s32.totalorder %s39, %s42
    %p51 = scmp.eq.s32.totalorder %s15, 3
    %p52 = por %p50, %p51
    %p53 = scmp.ne.s32.totalorder %s42, %s43
    %p54 = scmp.eq.s32.totalorder %s15, 0
    %p55 = por %p53, %p54
    %p56 = scmp.ne.s32.totalorder %s42, %s43
    %p57 = scmp.eq.s32.totalorder %s16, 3
    %p58 = por %p56, %p57
    %p60 = scmp.ne.s32.totalorder %s43, %s59
    %p61 = scmp.eq.s32.totalorder %s16, 0
    %p62 = por %p60, %p61
    %s63 = ssub.s32 %s17, %s36
    %p64 = scmp.eq.s32.totalorder %s63, 0
    %s66 = sadd.s32 %s65, 1
    %s67 = scalar_select %p64, %s65, %s66
    %p70 = pneg %p64
    %p71 = scmp.eq.s32.totalorder %s10, 3
    %p72 = por %p70, %p71
    %p73 = scmp.ne.s32.totalorder %s65, %s68
    %p74 = scmp.eq.s32.totalorder %s10, 0
    %p75 = por %p73, %p74
    %p76 = scmp.ne.s32.totalorder %s65, %s68
    %p77 = scmp.eq.s32.totalorder %s15, 3
    %p78 = por %p76, %p77
    %p79 = scmp.ne.s32.totalorder %s68, %s69
    %p80 = scmp.eq.s32.totalorder %s15, 0
    %p81 = por %p79, %p80
    %p82 = scmp.ne.s32.totalorder %s68, %s69
    %p83 = scmp.eq.s32.totalorder %s16, 3
    %p84 = por %p82, %p83
    %p86 = scmp.ne.s32.totalorder %s69, %s85
    %p87 = scmp.eq.s32.totalorder %s16, 0
    %p88 = por %p86, %p87
    %s90 = sadd.s32 %s89, 1
    %p93 = scmp.eq.s32.totalorder %s10, 3
    %p94 = scmp.ne.s32.totalorder %s89, %s91
    %p95 = scmp.eq.s32.totalorder %s10, 0
    %p96 = por %p94, %p95
    %p97 = scmp.ne.s32.totalorder %s89, %s91
    %p98 = scmp.eq.s32.totalorder %s15, 3
    %p99 = por %p97, %p98
    %p100 = scmp.ne.s32.totalorder %s91, %s92
    %p101 = scmp.eq.s32.totalorder %s15, 0
    %p102 = por %p100, %p101
    %p103 = scmp.ne.s32.totalorder %s91, %s92
    %p104 = scmp.eq.s32.totalorder %s16, 3
    %p105 = por %p103, %p104
    %p107 = scmp.ne.s32.totalorder %s92, %s106
    %p108 = scmp.eq.s32.totalorder %s16, 0
    %p109 = por %p107, %p108
    %s110 = smul.u32 %s18, 2
    %s111 = sadd.s32 %s110, %s19
    %s112 = smul.u32 %s32, 2
    %s113 = sadd.s32 %s112, %s28
    %s114 = ssub.s32 %s17, %s36
    %s115 = ssub.s32 %s111, %s113
    %s116 = sor.u32 %s114, %s115
    %p117 = scmp.eq.s32.totalorder %s116, 0
    %s119 = sadd.s32 %s118, 1
    %s120 = scalar_select %p117, %s118, %s119
    %p123 = pneg %p117
    %p124 = scmp.eq.s32.totalorder %s10, 3
    %p125 = por %p123, %p124
    %p126 = scmp.ne.s32.totalorder %s118, %s121
    %p127 = scmp.eq.s32.totalorder %s10, 0
    %p128 = por %p126, %p127
    %p129 = scmp.ne.s32.totalorder %s118, %s121
    %p130 = scmp.eq.s32.totalorder %s15, 3
    %p131 = por %p129, %p130
    %p132 = scmp.ne.s32.totalorder %s121, %s122
    %p133 = scmp.eq.s32.totalorder %s15, 0
    %p134 = por %p132, %p133
    %p135 = scmp.ne.s32.totalorder %s121, %s122
    %p136 = scmp.eq.s32.totalorder %s16, 3
    %p137 = por %p135, %p136
    %p139 = scmp.ne.s32.totalorder %s122, %s138
    %p140 = scmp.eq.s32.totalorder %s16, 0
    %p141 = por %p139, %p140
    %p142 = scmp.le.s32.totalorder 1, %s10
    %p143 = scmp.lt.s32.totalorder %s10, 5
    %p144 = pnand %p142, %p143
    %p145 = pneg %p144
    // Predicated region
    $region9: #{modulated_conv2d.1} parent=5 // pred_check
      _
    $region10: #{modulated_conv2d.1} parent=5 // pred_check_branch
      %147 = sbr.rel (%p144) target = $region12
    $region11: #{modulated_conv2d.1} parent=5 // pred_region
      %s148 = ssub.s32 %s10, 1
      // Predicated region
      $region13: #{modulated_conv2d.1} parent=11 // pred_check
        %p149 = pneg %p102
      $region14: #{modulated_conv2d.1} parent=11 // pred_check_branch
        %151 = sbr.rel (%p149) target = $region16
      $region15: #{modulated_conv2d.1} parent=11 // pred_region
        _
      $region16: #{modulated_conv2d.1} parent=11 // pred_fallthru
        _
    $region12: #{modulated_conv2d.1} parent=5 // pred_fallthru
      _
    %p152 = scmp.lt.s32.totalorder %s10, 4
    // Predicated region
    $region17: #{modulated_conv2d.1} parent=5 // pred_check
      %p153 = pneg %p152
    $region18: #{modulated_conv2d.1} parent=5 // pred_check_branch
      %155 = sbr.rel (%p153) target = $region20
    $region19: #{modulated_conv2d.1} parent=5 // pred_region
      // Predicated region
      $region21: #{modulated_conv2d.1} parent=19 // pred_check
        %p156 = pneg %p49
      $region22: #{modulated_conv2d.1} parent=19 // pred_check_branch
        %158 = sbr.rel (%p156) target = $region24
      $region23: #{modulated_conv2d.1} parent=19 // pred_region
        %p159 = scmp.lt.s32.totalorder %s17, 1
        %s160 = scalar_select %p159, %s17, 1
        %s161 = smul.addr %s160, 4
        %s162 = scalar_lea.vmem %s0, %s161
      $region24: #{modulated_conv2d.1} parent=19 // pred_fallthru
        _
      // Predicated region
      $region25: #{modulated_conv2d.1} parent=19 // pred_check
        %p163 = pneg %p75
      $region26: #{modulated_conv2d.1} parent=19 // pred_check_branch
        %165 = sbr.rel (%p163) target = $region28
      $region27: #{modulated_conv2d.1} parent=19 // pred_region
        %p166 = scmp.lt.s32.totalorder %s17, 1
        %s167 = scalar_select %p166, %s17, 1
        %s168 = smul.addr %s167, 8
        %s169 = scalar_lea.vmem %s1, %s168
      $region28: #{modulated_conv2d.1} parent=19 // pred_fallthru
        _
    $region20: #{modulated_conv2d.1} parent=5 // pred_fallthru
      _
    %p170 = scmp.le.s32.totalorder 1, %s10
    %p171 = scmp.lt.s32.totalorder %s10, 5
    %p172 = pnand %p170, %p171
    %p173 = pneg %p172
    // Predicated region
    $region29: #{modulated_conv2d.1} parent=5 // pred_check
      _
    $region30: #{modulated_conv2d.1} parent=5 // pred_check_branch
      %175 = sbr.rel (%p172) target = $region32
    $region31: #{modulated_conv2d.1} parent=5 // pred_region
      %s176 = ssub.s32 %s10, 1
      %p177 = scmp.lt.s32.totalorder %s20, 1
      %s178 = scalar_select %p177, %s20, 1
      %s179 = smul.addr %s178, 4
      %s180 = scalar_lea.vmem %s0, %s179
      %p181 = pneg %p55
      %p182 = pneg %p52
      %p183 = scmp.lt.s32.totalorder %s20, 1
      %s184 = scalar_select %p183, %s20, 1
      %s185 = smul.addr %s184, 8
      %s186 = scalar_lea.vmem %s1, %s185
      %p187 = pneg %p81
      %p188 = pneg %p78
      %p189 = pneg %p102
      %p190 = pneg %p99
      %p191 = pneg %p134
      %p192 = pneg %p131
      %s193 = smul.u32 %s21, 2
      %s194 = sadd.s32 %s193, %s22
      %s195 = smul.u32 2, %s194
      %p196 = scmp.lt.s32.totalorder %s20, 1
      %s197 = scalar_select %p196, %s20, 1
      %p198 = scmp.lt.s32.totalorder %s195, 3
      %s199 = scalar_select %p198, %s195, 3
      %s200 = smul.addr %s197, 4
      %s201 = sadd.s32 %s199, %s200
      %s202 = smul.addr %s201, 8
      %s203 = scalar_lea.vmem %s4, %s202
      %p204 = scmp.lt.s32.totalorder %s20, 1
      %s205 = scalar_select %p204, %s20, 1
      %s206 = smul.addr %s205, 4
      %s207 = scalar_lea.vmem %s0, %s206
      %p208 = scmp.lt.s32.totalorder %s20, 1
      %s209 = scalar_select %p208, %s20, 1
      %s210 = smul.addr %s209, 8
      %s211 = scalar_lea.vmem %s1, %s210
      %s212 = smul.u32 %s21, 2
      %s213 = sadd.s32 %s212, %s22
      %s214 = smul.u32 2, %s213
      %p215 = scmp.lt.s32.totalorder %s20, 1
      %s216 = scalar_select %p215, %s20, 1
      %p217 = scmp.lt.s32.totalorder %s214, 3
      %s218 = scalar_select %p217, %s214, 3
      %s219 = smul.addr %s216, 4
      %s220 = sadd.s32 %s218, %s219
      %s221 = smul.addr %s220, 8
      %s222 = scalar_lea.vmem %s4, %s221
      %s223 = smul.u32 %s21, 2
      %s224 = sadd.s32 %s223, %s22
      %s225 = smul.u32 2, %s224
      %s227 = smul.u32 %s21, 2
      %p228 = scmp.eq.s32.totalorder %s22, 0
      // Predicated region
      $region33: #{modulated_conv2d.1} parent=31 // pred_check
        %p229 = pneg %p228
      $region34: #{modulated_conv2d.1} parent=31 // pred_check_branch
        %231 = sbr.rel (%p229) target = $region36
      $region35: #{modulated_conv2d.1} parent=31 // pred_region
        %s232 = smul.u32 %s21, 512
        %s233 = sshra.s32 %s232, 7
        %s234 = sand.u32 %s232, 127
        %s235 = smul.u32 %s20, 5
        %s236 = sadd.s32 %s233, %s235
        %s237 = smul.addr %s236, 2
        %s238 = scalar_lea.vmem %s3, %s237
        %p240 = scmp.lt.u32.totalorder 6, 8
        %p241 = pneg %p240
        // Predicated region
        $region37: #{modulated_conv2d.1} parent=35 // pred_check
          _
        $region38: #{modulated_conv2d.1} parent=35 // pred_check_branch
          %243 = sbr.rel (%p240) target = $region40
        $region39: #{modulated_conv2d.1} parent=35 // pred_region
          %s258 = sand.u32 6, 7
          %p259 = scmp.eq.s32.totalorder %s258, 0
          %p260 = pneg %p259
          // Predicated region
          $region52: #{modulated_conv2d.1} parent=39 // pred_check
            _
          $region53: #{modulated_conv2d.1} parent=39 // pred_check_branch
            %262 = sbr.rel (%p259) target = $region55
          $region54: #{modulated_conv2d.1} parent=39 // pred_region
            %s263 = sand.u32 6, 7
            %s264 = ssub.s32 6, %s263
            %s265 = scalar_lea.vmem %s238, %s264
            %s266 = ssub.s32 6, %s263
            %s267 = scalar_lea.vmem [#allocation2], %s266
            %s268 = sshllo.u32 0, %s263
            loop: start=0, step=1, limit=1
            $region56: #{modulated_conv2d.1} parent=54 // loop_pre_header
              _
            $region57: #{modulated_conv2d.1} parent=54 // loop_header
              %s270 = sphi 0, %s274
              %p271 = scmp.ge.s32.totalorder %s270, 1
              %s275 = sphi %s265, %s265
              %s276 = sphi %s267, %s267
            $region58: #{modulated_conv2d.1} parent=54 // loop_header_branch
              %273 = sbr.rel (%p271) target = $region62
            $region59: #{modulated_conv2d.1} parent=54 // loop_body
              %v277 = vld [vmem:[%s275] sm:%s268]
              %278 = vst [vmem:[%s276] sm:%s268] %v277
            $region60: #{modulated_conv2d.1} parent=54 // loop_footer
              %s274 = sadd.s32 1, %s270
            $region61: #{modulated_conv2d.1} parent=54 // loop_footer_branch
              %269 = sbr.rel target = $region57
            $region62: #{modulated_conv2d.1} parent=54 // loop_exit
              _
          $region55: #{modulated_conv2d.1} parent=39 // pred_fallthru
            _
        $region40: #{modulated_conv2d.1} parent=35 // pred_fallthru
          _
        // Predicated region
        $region41: #{modulated_conv2d.1} parent=35 // pred_check
          %p244 = pneg %p240
        $region42: #{modulated_conv2d.1} parent=35 // pred_check_branch
          %246 = sbr.rel (%p244) target = $region44
        $region43: #{modulated_conv2d.1} parent=35 // pred_region
          %s247 = sshllo.u32 0, 6
          loop: start=0, step=1, limit=1
          $region45: #{modulated_conv2d.1} parent=43 // loop_pre_header
            _
          $region46: #{modulated_conv2d.1} parent=43 // loop_header
            %s249 = sphi 0, %s253
            %p250 = scmp.ge.s32.totalorder %s249, 1
            %s254 = sphi %s238, %s238
            %s255 = sphi [#allocation2], [#allocation2]
          $region47: #{modulated_conv2d.1} parent=43 // loop_header_branch
            %252 = sbr.rel (%p250) target = $region51
          $region48: #{modulated_conv2d.1} parent=43 // loop_body
            %v256 = vld [vmem:[%s254] sm:%s247]
            %257 = vst [vmem:[%s255] sm:%s247] %v256
          $region49: #{modulated_conv2d.1} parent=43 // loop_footer
            %s253 = sadd.s32 1, %s249
          $region50: #{modulated_conv2d.1} parent=43 // loop_footer_branch
            %248 = sbr.rel target = $region46
          $region51: #{modulated_conv2d.1} parent=43 // loop_exit
            _
        $region44: #{modulated_conv2d.1} parent=35 // pred_fallthru
          _
        // Predicated region
        $region63: #{modulated_conv2d.1} parent=35 // pred_check
          _
        $region64: #{modulated_conv2d.1} parent=35 // pred_check_branch
          %281 = sbr.rel (0) target = $region66
        $region65: #{modulated_conv2d.1} parent=35 // pred_region
          %282 = vsyncadd [#allocation3], 96
        $region66: #{modulated_conv2d.1} parent=35 // pred_fallthru
          _
      $region36: #{modulated_conv2d.1} parent=31 // pred_fallthru
        _
      %s283 = sand.u32 %s22, 1
      %s284 = sadd.s32 %s22, 1
      %p285 = scmp.lt.s32.totalorder %s284, 2
      // Predicated region
      $region67: #{modulated_conv2d.1} parent=31 // pred_check
        %p286 = pneg %p285
      $region68: #{modulated_conv2d.1} parent=31 // pred_check_branch
        %288 = sbr.rel (%p286) target = $region70
      $region69: #{modulated_conv2d.1} parent=31 // pred_region
        %s289 = sadd.s32 %s227, %s22
        %s290 = sadd.s32 %s289, 1
        %s291 = ssub.s32 1, %s283
        %s292 = smul.u32 %s290, 256
        %s293 = sshra.s32 %s292, 7
        %s294 = sand.u32 %s292, 127
        %s295 = smul.u32 %s20, 5
        %s296 = sadd.s32 %s293, %s295
        %s297 = smul.addr %s296, 2
        %s298 = scalar_lea.vmem %s3, %s297
        %s299 = smul.u32 %s291, 3
        %s300 = smul.addr %s299, 2
        %s301 = scalar_lea.vmem [#allocation2], %s300
        %s302 = scalar_lea.sflag [#allocation3], %s291
        %p304 = scmp.lt.u32.totalorder 6, 8
        %p305 = pneg %p304
        // Predicated region
        $region71: #{modulated_conv2d.1} parent=69 // pred_check
          _
        $region72: #{modulated_conv2d.1} parent=69 // pred_check_branch
          %307 = sbr.rel (%p304) target = $region74
        $region73: #{modulated_conv2d.1} parent=69 // pred_region
          %s322 = sand.u32 6, 7
          %p323 = scmp.eq.s32.totalorder %s322, 0
          %p324 = pneg %p323
          // Predicated region
          $region86: #{modulated_conv2d.1} parent=73 // pred_check
            _
          $region87: #{modulated_conv2d.1} parent=73 // pred_check_branch
            %326 = sbr.rel (%p323) target = $region89
          $region88: #{modulated_conv2d.1} parent=73 // pred_region
            %s327 = sand.u32 6, 7
            %s328 = ssub.s32 6, %s327
            %s329 = scalar_lea.vmem %s298, %s328
            %s330 = ssub.s32 6, %s327
            %s331 = scalar_lea.vmem %s301, %s330 [#allocation2]
            %s332 = sshllo.u32 0, %s327
            loop: start=0, step=1, limit=1
            $region90: #{modulated_conv2d.1} parent=88 // loop_pre_header
              _
            $region91: #{modulated_conv2d.1} parent=88 // loop_header
              %s334 = sphi 0, %s338
              %p335 = scmp.ge.s32.totalorder %s334, 1
              %s339 = sphi %s329, %s329
              %s340 = sphi %s331, %s331
            $region92: #{modulated_conv2d.1} parent=88 // loop_header_branch
              %337 = sbr.rel (%p335) target = $region96
            $region93: #{modulated_conv2d.1} parent=88 // loop_body
              %v341 = vld [vmem:[%s339] sm:%s332]
              %342 = vst [vmem:[%s340] sm:%s332] %v341
            $region94: #{modulated_conv2d.1} parent=88 // loop_footer
              %s338 = sadd.s32 1, %s334
            $region95: #{modulated_conv2d.1} parent=88 // loop_footer_branch
              %333 = sbr.rel target = $region91
            $region96: #{modulated_conv2d.1} parent=88 // loop_exit
              _
          $region89: #{modulated_conv2d.1} parent=73 // pred_fallthru
            _
        $region74: #{modulated_conv2d.1} parent=69 // pred_fallthru
          _
        // Predicated region
        $region75: #{modulated_conv2d.1} parent=69 // pred_check
          %p308 = pneg %p304
        $region76: #{modulated_conv2d.1} parent=69 // pred_check_branch
          %310 = sbr.rel (%p308) target = $region78
        $region77: #{modulated_conv2d.1} parent=69 // pred_region
          %s311 = sshllo.u32 0, 6
          loop: start=0, step=1, limit=1
          $region79: #{modulated_conv2d.1} parent=77 // loop_pre_header
            _
          $region80: #{modulated_conv2d.1} parent=77 // loop_header
            %s313 = sphi 0, %s317
            %p314 = scmp.ge.s32.totalorder %s313, 1
            %s318 = sphi %s298, %s298
            %s319 = sphi %s301, %s301
          $region81: #{modulated_conv2d.1} parent=77 // loop_header_branch
            %316 = sbr.rel (%p314) target = $region85
          $region82: #{modulated_conv2d.1} parent=77 // loop_body
            %v320 = vld [vmem:[%s318] sm:%s311]
            %321 = vst [vmem:[%s319] sm:%s311] %v320
          $region83: #{modulated_conv2d.1} parent=77 // loop_footer
            %s317 = sadd.s32 1, %s313
          $region84: #{modulated_conv2d.1} parent=77 // loop_footer_branch
            %312 = sbr.rel target = $region80
          $region85: #{modulated_conv2d.1} parent=77 // loop_exit
            _
        $region78: #{modulated_conv2d.1} parent=69 // pred_fallthru
          _
        // Predicated region
        $region97: #{modulated_conv2d.1} parent=69 // pred_check
          _
        $region98: #{modulated_conv2d.1} parent=69 // pred_check_branch
          %345 = sbr.rel (0) target = $region100
        $region99: #{modulated_conv2d.1} parent=69 // pred_region
          %346 = vsyncadd %s302, 96
        $region100: #{modulated_conv2d.1} parent=69 // pred_fallthru
          _
      $region70: #{modulated_conv2d.1} parent=31 // pred_fallthru
        _
      %s347 = smul.u32 %s283, 3
      %s348 = smul.addr %s347, 2
      %s349 = scalar_lea.vmem [#allocation2], %s348
      %s350 = scalar_lea.sflag [#allocation3], %s283
      %s351 = smul.u32 2, 1
      %s352 = smul.u32 %s351, 3
      %s353 = sshll.u32 %s352, 4
      %354 = dma.done %s350, %s353
      %v355 = vld [vmem:[%s349] sm:$0x3f]
      %v356 = vld [vmem:[%s207] sm:$0xf]
      %v357 = vunpack.c.l.bf16 %v355
      %v358 = vunpack.c.h.bf16 %v355
      %360 = vset.pattern.permute.xlu0 0
      %361 = vperm.xlu0 %360, %v356
      %v362 = vpop.permute.xlu0 %361
      %v364 = vunpack.c.l.s4 839922192
      %v365 = vunpack.c.0.s8 %v364
      %v366 = vlaneseq
      %v367 = vshrl.u32 %v366, 7
      %v368 = vsub.s32 %v365, %v367
      %v369 = vrot.slane %v362, %v368
      %v371 = vmul.f32 %v357, %v369
      %v372 = vmul.f32 %v358, %v369
      %v374 = vcombine.high %v371, %v371
      %v376 = vpack.c.bf16 %v371, %v371
      %v377 = vpack.c.bf16 %v374, %v374
      %v378 = vpack.c.bf16 %v372, %v372
      %v379 = vld [vmem:[%s2] sm:$0xf]
      %s380 = scalar_lea.vmem %s2, 4
      %v381 = vld [vmem:[%s380] sm:$0xf]
      %385 = vrot.lane.b32.xlu0 %v376, 127
      %v386 = vpop.permute.xlu0 %385
      %387 = vrot.lane.b32.xlu0 %v377, 127
      %v388 = vpop.permute.xlu0 %387
      %389 = vrot.lane.b32.xlu0 %v378, 127
      %v390 = vpop.permute.xlu0 %389
      %vm391 = vcmask 1039360
      %v392 = vsel %vm391, %v386, %v388
      %v393 = vsel %vm391, %v388, %v390
      %vm394 = vcmask 31744
      %v396 = vsel %vm394, %v381, 0
      %vm398 = vcmask 1041408
      %v400 = vsel %vm398, %v392, 0
      %v403 = vsel %vm398, %v393, 0
      %405 = vmatprep.subr.bf16.mxu0 %v403
      %406 = vmatpush1.bf16.msra.mxu0 %v400
      %407 = vmatprep.subr.bf16.mxu0 0
      %408 = vmatpush1.bf16.msra.mxu0 0
      %409 = vmatprep.subr.bf16.mxu0 0
      %410 = vmatpush1.bf16.msra.mxu0 0
      %411 = vmatprep.subr.bf16.mxu0 0
      %412 = vmatpush1.bf16.msra.mxu0 0
      %413 = vmatprep.subr.bf16.mxu0 0
      %414 = vmatpush1.bf16.msra.mxu0 0
      %415 = vmatprep.subr.bf16.mxu0 0
      %416 = vmatpush1.bf16.msra.mxu0 0
      %417 = vmatprep.subr.bf16.mxu0 0
      %418 = vmatpush1.bf16.msra.mxu0 0
      %419 = vmatprep.subr.bf16.mxu0 0
      %420 = vmatpush1.bf16.msra.mxu0 0
      %421 = vmatprep.subr.bf16.mxu0 0
      %422 = vmatpush1.bf16.msra.mxu0 0
      %423 = vmatprep.subr.bf16.mxu0 0
      %424 = vmatpush1.bf16.msra.mxu0 0
      %425 = vmatprep.subr.bf16.mxu0 0
      %426 = vmatpush1.bf16.msra.mxu0 0
      %427 = vmatprep.subr.bf16.mxu0 0
      %428 = vmatpush1.bf16.msra.mxu0 0
      %429 = vmatprep.subr.bf16.mxu0 0
      %430 = vmatpush1.bf16.msra.mxu0 0
      %431 = vmatprep.subr.bf16.mxu0 0
      %432 = vmatpush1.bf16.msra.mxu0 0
      %433 = vmatprep.subr.bf16.mxu0 0
      %434 = vmatpush1.bf16.msra.mxu0 0
      %435 = vmatprep.subr.bf16.mxu0 0
      %436 = vmatpush1.bf16.msra.mxu0 0
      %437 = vmatprep.mubr.bf16.mxu0 0
      %438 = vmatmul.mubr.bf16.gmra.mrb[0].mxu0 %v396
      %v439 = vpop.f32.mrb[0].mxu0
      %v440 = vadd.f32 0.0, %v439
      %v441 = vpop.f32.mrb[0].mxu0
      %v442 = vadd.f32 0.0, %v441
      %v443 = vpop.f32.mrb[0].mxu0
      %v444 = vpop.f32.mrb[0].mxu0
      %445 = vdwg.mxu0
      %v447 = vsel %vm394, %v379, 0
      %v450 = vsel %vm398, %v376, 0
      %v453 = vsel %vm398, %v377, 0
      %455 = vmatprep.subr.bf16.mxu0 %v453
      %456 = vmatpush1.bf16.msra.mxu0 %v450
      %457 = vmatprep.subr.bf16.mxu0 0
      %458 = vmatpush1.bf16.msra.mxu0 0
      %459 = vmatprep.subr.bf16.mxu0 0
      %460 = vmatpush1.bf16.msra.mxu0 0
      %461 = vmatprep.subr.bf16.mxu0 0
      %462 = vmatpush1.bf16.msra.mxu0 0
      %463 = vmatprep.subr.bf16.mxu0 0
      %464 = vmatpush1.bf16.msra.mxu0 0
      %465 = vmatprep.subr.bf16.mxu0 0
      %466 = vmatpush1.bf16.msra.mxu0 0
      %467 = vmatprep.subr.bf16.mxu0 0
      %468 = vmatpush1.bf16.msra.mxu0 0
      %469 = vmatprep.subr.bf16.mxu0 0
      %470 = vmatpush1.bf16.msra.mxu0 0
      %471 = vmatprep.subr.bf16.mxu0 0
      %472 = vmatpush1.bf16.msra.mxu0 0
      %473 = vmatprep.subr.bf16.mxu0 0
      %474 = vmatpush1.bf16.msra.mxu0 0
      %475 = vmatprep.subr.bf16.mxu0 0
      %476 = vmatpush1.bf16.msra.mxu0 0
      %477 = vmatprep.subr.bf16.mxu0 0
      %478 = vmatpush1.bf16.msra.mxu0 0
      %479 = vmatprep.subr.bf16.mxu0 0
      %480 = vmatpush1.bf16.msra.mxu0 0
      %481 = vmatprep.subr.bf16.mxu0 0
      %482 = vmatpush1.bf16.msra.mxu0 0
      %483 = vmatprep.subr.bf16.mxu0 0
      %484 = vmatpush1.bf16.msra.mxu0 0
      %485 = vmatprep.subr.bf16.mxu0 0
      %486 = vmatpush1.bf16.msra.mxu0 0
      %487 = vmatprep.mubr.bf16.mxu0 0
      %488 = vmatmul.mubr.bf16.gmra.mrb[0].mxu0 %v447
      %v489 = vpop.f32.mrb[0].mxu0
      %v490 = vadd.f32 %v440, %v489
      %v491 = vpop.f32.mrb[0].mxu0
      %v492 = vadd.f32 %v442, %v491
      %v493 = vpop.f32.mrb[0].mxu0
      %v494 = vpop.f32.mrb[0].mxu0
      %495 = vdwg.mxu0
      %s496 = scalar_lea.vmem %s2, 8
      %v497 = vld [vmem:[%s496] sm:$0xf]
      %498 = vrot.lane.b32.xlu0 %v376, 126
      %v499 = vpop.permute.xlu0 %498
      %500 = vrot.lane.b32.xlu0 %v377, 126
      %v501 = vpop.permute.xlu0 %500
      %502 = vrot.lane.b32.xlu0 %v378, 126
      %v503 = vpop.permute.xlu0 %502
      %vm504 = vcmask 1031168
      %v505 = vsel %vm504, %v499, %v501
      %v506 = vsel %vm504, %v501, %v503
      %v508 = vsel %vm394, %v497, 0
      %v511 = vsel %vm398, %v505, 0
      %v514 = vsel %vm398, %v506, 0
      %516 = vmatprep.subr.bf16.mxu0 %v514
      %517 = vmatpush1.bf16.msra.mxu0 %v511
      %518 = vmatprep.subr.bf16.mxu0 0
      %519 = vmatpush1.bf16.msra.mxu0 0
      %520 = vmatprep.subr.bf16.mxu0 0
      %521 = vmatpush1.bf16.msra.mxu0 0
      %522 = vmatprep.subr.bf16.mxu0 0
      %523 = vmatpush1.bf16.msra.mxu0 0
      %524 = vmatprep.subr.bf16.mxu0 0
      %525 = vmatpush1.bf16.msra.mxu0 0
      %526 = vmatprep.subr.bf16.mxu0 0
      %527 = vmatpush1.bf16.msra.mxu0 0
      %528 = vmatprep.subr.bf16.mxu0 0
      %529 = vmatpush1.bf16.msra.mxu0 0
      %530 = vmatprep.subr.bf16.mxu0 0
      %531 = vmatpush1.bf16.msra.mxu0 0
      %532 = vmatprep.subr.bf16.mxu0 0
      %533 = vmatpush1.bf16.msra.mxu0 0
      %534 = vmatprep.subr.bf16.mxu0 0
      %535 = vmatpush1.bf16.msra.mxu0 0
      %536 = vmatprep.subr.bf16.mxu0 0
      %537 = vmatpush1.bf16.msra.mxu0 0
      %538 = vmatprep.subr.bf16.mxu0 0
      %539 = vmatpush1.bf16.msra.mxu0 0
      %540 = vmatprep.subr.bf16.mxu0 0
      %541 = vmatpush1.bf16.msra.mxu0 0
      %542 = vmatprep.subr.bf16.mxu0 0
      %543 = vmatpush1.bf16.msra.mxu0 0
      %544 = vmatprep.subr.bf16.mxu0 0
      %545 = vmatpush1.bf16.msra.mxu0 0
      %546 = vmatprep.subr.bf16.mxu0 0
      %547 = vmatpush1.bf16.msra.mxu0 0
      %548 = vmatprep.mubr.bf16.mxu0 0
      %549 = vmatmul.mubr.bf16.gmra.mrb[0].mxu0 %v508
      %v550 = vpop.f32.mrb[0].mxu0
      %v551 = vadd.f32 0.0, %v550
      %v552 = vpop.f32.mrb[0].mxu0
      %v553 = vadd.f32 0.0, %v552
      %v554 = vpop.f32.mrb[0].mxu0
      %v555 = vpop.f32.mrb[0].mxu0
      %556 = vdwg.mxu0
      %v557 = vadd.f32 %v490, %v551
      %v558 = vadd.f32 %v492, %v553
      %s559 = scalar_lea.vmem %s2, 12
      %v560 = vld [vmem:[%s559] sm:$0xf]
      %561 = vrot.lane.b32.xlu0 %v376, 110
      %v562 = vpop.permute.xlu0 %561
      %563 = vrot.lane.b32.xlu0 %v377, 110
      %v564 = vpop.permute.xlu0 %563
      %565 = vrot.lane.b32.xlu0 %v378, 110
      %v566 = vpop.permute.xlu0 %565
      %vm567 = vcmask 900096
      %v568 = vsel %vm567, %v562, %v564
      %v569 = vsel %vm567, %v564, %v566
      %v571 = vsel %vm394, %v560, 0
      %v574 = vsel %vm398, %v568, 0
      %v577 = vsel %vm398, %v569, 0
      %579 = vmatprep.subr.bf16.mxu0 %v577
      %580 = vmatpush1.bf16.msra.mxu0 %v574
      %581 = vmatprep.subr.bf16.mxu0 0
      %582 = vmatpush1.bf16.msra.mxu0 0
      %583 = vmatprep.subr.bf16.mxu0 0
      %584 = vmatpush1.bf16.msra.mxu0 0
      %585 = vmatprep.subr.bf16.mxu0 0
      %586 = vmatpush1.bf16.msra.mxu0 0
      %587 = vmatprep.subr.bf16.mxu0 0
      %588 = vmatpush1.bf16.msra.mxu0 0
      %589 = vmatprep.subr.bf16.mxu0 0
      %590 = vmatpush1.bf16.msra.mxu0 0
      %591 = vmatprep.subr.bf16.mxu0 0
      %592 = vmatpush1.bf16.msra.mxu0 0
      %593 = vmatprep.subr.bf16.mxu0 0
      %594 = vmatpush1.bf16.msra.mxu0 0
      %595 = vmatprep.subr.bf16.mxu0 0
      %596 = vmatpush1.bf16.msra.mxu0 0
      %597 = vmatprep.subr.bf16.mxu0 0
      %598 = vmatpush1.bf16.msra.mxu0 0
      %599 = vmatprep.subr.bf16.mxu0 0
      %600 = vmatpush1.bf16.msra.mxu0 0
      %601 = vmatprep.subr.bf16.mxu0 0
      %602 = vmatpush1.bf16.msra.mxu0 0
      %603 = vmatprep.subr.bf16.mxu0 0
      %604 = vmatpush1.bf16.msra.mxu0 0
      %605 = vmatprep.subr.bf16.mxu0 0
      %606 = vmatpush1.bf16.msra.mxu0 0
      %607 = vmatprep.subr.bf16.mxu0 0
      %608 = vmatpush1.bf16.msra.mxu0 0
      %609 = vmatprep.subr.bf16.mxu0 0
      %610 = vmatpush1.bf16.msra.mxu0 0
      %611 = vmatprep.mubr.bf16.mxu0 0
      %612 = vmatmul.mubr.bf16.gmra.mrb[0].mxu0 %v571
      %v613 = vpop.f32.mrb[0].mxu0
      %v614 = vadd.f32 0.0, %v613
      %v615 = vpop.f32.mrb[0].mxu0
      %v616 = vadd.f32 0.0, %v615
      %v617 = vpop.f32.mrb[0].mxu0
      %v618 = vpop.f32.mrb[0].mxu0
      %619 = vdwg.mxu0
      %v620 = vadd.f32 %v557, %v614
      %v621 = vadd.f32 %v558, %v616
      %s622 = scalar_lea.vmem %s2, 16
      %v623 = vld [vmem:[%s622] sm:$0xf]
      %624 = vrot.lane.b32.xlu0 %v376, 109
      %v625 = vpop.permute.xlu0 %624
      %626 = vrot.lane.b32.xlu0 %v377, 109
      %v627 = vpop.permute.xlu0 %626
      %628 = vrot.lane.b32.xlu0 %v378, 109
      %v629 = vpop.permute.xlu0 %628
      %vm630 = vcmask 891904
      %v631 = vsel %vm630, %v625, %v627
      %v632 = vsel %vm630, %v627, %v629
      %v634 = vsel %vm394, %v623, 0
      %v637 = vsel %vm398, %v631, 0
      %v640 = vsel %vm398, %v632, 0
      %642 = vmatprep.subr.bf16.mxu0 %v640
      %643 = vmatpush1.bf16.msra.mxu0 %v637
      %644 = vmatprep.subr.bf16.mxu0 0
      %645 = vmatpush1.bf16.msra.mxu0 0
      %646 = vmatprep.subr.bf16.mxu0 0
      %647 = vmatpush1.bf16.msra.mxu0 0
      %648 = vmatprep.subr.bf16.mxu0 0
      %649 = vmatpush1.bf16.msra.mxu0 0
      %650 = vmatprep.subr.bf16.mxu0 0
      %651 = vmatpush1.bf16.msra.mxu0 0
      %652 = vmatprep.subr.bf16.mxu0 0
      %653 = vmatpush1.bf16.msra.mxu0 0
      %654 = vmatprep.subr.bf16.mxu0 0
      %655 = vmatpush1.bf16.msra.mxu0 0
      %656 = vmatprep.subr.bf16.mxu0 0
      %657 = vmatpush1.bf16.msra.mxu0 0
      %658 = vmatprep.subr.bf16.mxu0 0
      %659 = vmatpush1.bf16.msra.mxu0 0
      %660 = vmatprep.subr.bf16.mxu0 0
      %661 = vmatpush1.bf16.msra.mxu0 0
      %662 = vmatprep.subr.bf16.mxu0 0
      %663 = vmatpush1.bf16.msra.mxu0 0
      %664 = vmatprep.subr.bf16.mxu0 0
      %665 = vmatpush1.bf16.msra.mxu0 0
      %666 = vmatprep.subr.bf16.mxu0 0
      %667 = vmatpush1.bf16.msra.mxu0 0
      %668 = vmatprep.subr.bf16.mxu0 0
      %669 = vmatpush1.bf16.msra.mxu0 0
      %670 = vmatprep.subr.bf16.mxu0 0
      %671 = vmatpush1.bf16.msra.mxu0 0
      %672 = vmatprep.subr.bf16.mxu0 0
      %673 = vmatpush1.bf16.msra.mxu0 0
      %674 = vmatprep.mubr.bf16.mxu0 0
      %675 = vmatmul.mubr.bf16.gmra.mrb[0].mxu0 %v634
      %v676 = vpop.f32.mrb[0].mxu0
      %v677 = vadd.f32 0.0, %v676
      %v678 = vpop.f32.mrb[0].mxu0
      %v679 = vadd.f32 0.0, %v678
      %v680 = vpop.f32.mrb[0].mxu0
      %v681 = vpop.f32.mrb[0].mxu0
      %682 = vdwg.mxu0
      %v683 = vadd.f32 %v620, %v677
      %v684 = vadd.f32 %v621, %v679
      %s685 = scalar_lea.vmem %s2, 20
      %v686 = vld [vmem:[%s685] sm:$0xf]
      %687 = vrot.lane.b32.xlu0 %v376, 108
      %v688 = vpop.permute.xlu0 %687
      %689 = vrot.lane.b32.xlu0 %v377, 108
      %v690 = vpop.permute.xlu0 %689
      %691 = vrot.lane.b32.xlu0 %v378, 108
      %v692 = vpop.permute.xlu0 %691
      %vm693 = vcmask 883712
      %v694 = vsel %vm693, %v688, %v690
      %v695 = vsel %vm693, %v690, %v692
      %v697 = vsel %vm394, %v686, 0
      %v700 = vsel %vm398, %v694, 0
      %v703 = vsel %vm398, %v695, 0
      %705 = vmatprep.subr.bf16.mxu0 %v703
      %706 = vmatpush1.bf16.msra.mxu0 %v700
      %707 = vmatprep.subr.bf16.mxu0 0
      %708 = vmatpush1.bf16.msra.mxu0 0
      %709 = vmatprep.subr.bf16.mxu0 0
      %710 = vmatpush1.bf16.msra.mxu0 0
      %711 = vmatprep.subr.bf16.mxu0 0
      %712 = vmatpush1.bf16.msra.mxu0 0
      %713 = vmatprep.subr.bf16.mxu0 0
      %714 = vmatpush1.bf16.msra.mxu0 0
      %715 = vmatprep.subr.bf16.mxu0 0
      %716 = vmatpush1.bf16.msra.mxu0 0
      %717 = vmatprep.subr.bf16.mxu0 0
      %718 = vmatpush1.bf16.msra.mxu0 0
      %719 = vmatprep.subr.bf16.mxu0 0
      %720 = vmatpush1.bf16.msra.mxu0 0
      %721 = vmatprep.subr.bf16.mxu0 0
      %722 = vmatpush1.bf16.msra.mxu0 0
      %723 = vmatprep.subr.bf16.mxu0 0
      %724 = vmatpush1.bf16.msra.mxu0 0
      %725 = vmatprep.subr.bf16.mxu0 0
      %726 = vmatpush1.bf16.msra.mxu0 0
      %727 = vmatprep.subr.bf16.mxu0 0
      %728 = vmatpush1.bf16.msra.mxu0 0
      %729 = vmatprep.subr.bf16.mxu0 0
      %730 = vmatpush1.bf16.msra.mxu0 0
      %731 = vmatprep.subr.bf16.mxu0 0
      %732 = vmatpush1.bf16.msra.mxu0 0
      %733 = vmatprep.subr.bf16.mxu0 0
      %734 = vmatpush1.bf16.msra.mxu0 0
      %735 = vmatprep.subr.bf16.mxu0 0
      %736 = vmatpush1.bf16.msra.mxu0 0
      %737 = vmatprep.mubr.bf16.mxu0 0
      %738 = vmatmul.mubr.bf16.gmra.mrb[0].mxu0 %v697
      %v739 = vpop.f32.mrb[0].mxu0
      %v740 = vadd.f32 0.0, %v739
      %v741 = vpop.f32.mrb[0].mxu0
      %v742 = vadd.f32 0.0, %v741
      %v743 = vpop.f32.mrb[0].mxu0
      %v744 = vpop.f32.mrb[0].mxu0
      %745 = vdwg.mxu0
      %v746 = vadd.f32 %v683, %v740
      %v747 = vadd.f32 %v684, %v742
      %s748 = scalar_lea.vmem %s2, 24
      %v749 = vld [vmem:[%s748] sm:$0xf]
      %750 = vrot.lane.b32.xlu0 %v376, 92
      %v751 = vpop.permute.xlu0 %750
      %752 = vrot.lane.b32.xlu0 %v377, 92
      %v753 = vpop.permute.xlu0 %752
      %754 = vrot.lane.b32.xlu0 %v378, 92
      %v755 = vpop.permute.xlu0 %754
      %vm756 = vcmask 752640
      %v757 = vsel %vm756, %v751, %v753
      %v758 = vsel %vm756, %v753, %v755
      %v760 = vsel %vm394, %v749, 0
      %v763 = vsel %vm398, %v757, 0
      %v766 = vsel %vm398, %v758, 0
      %768 = vmatprep.subr.bf16.mxu0 %v766
      %769 = vmatpush1.bf16.msra.mxu0 %v763
      %770 = vmatprep.subr.bf16.mxu0 0
      %771 = vmatpush1.bf16.msra.mxu0 0
      %772 = vmatprep.subr.bf16.mxu0 0
      %773 = vmatpush1.bf16.msra.mxu0 0
      %774 = vmatprep.subr.bf16.mxu0 0
      %775 = vmatpush1.bf16.msra.mxu0 0
      %776 = vmatprep.subr.bf16.mxu0 0
      %777 = vmatpush1.bf16.msra.mxu0 0
      %778 = vmatprep.subr.bf16.mxu0 0
      %779 = vmatpush1.bf16.msra.mxu0 0
      %780 = vmatprep.subr.bf16.mxu0 0
      %781 = vmatpush1.bf16.msra.mxu0 0
      %782 = vmatprep.subr.bf16.mxu0 0
      %783 = vmatpush1.bf16.msra.mxu0 0
      %784 = vmatprep.subr.bf16.mxu0 0
      %785 = vmatpush1.bf16.msra.mxu0 0
      %786 = vmatprep.subr.bf16.mxu0 0
      %787 = vmatpush1.bf16.msra.mxu0 0
      %788 = vmatprep.subr.bf16.mxu0 0
      %789 = vmatpush1.bf16.msra.mxu0 0
      %790 = vmatprep.subr.bf16.mxu0 0
      %791 = vmatpush1.bf16.msra.mxu0 0
      %792 = vmatprep.subr.bf16.mxu0 0
      %793 = vmatpush1.bf16.msra.mxu0 0
      %794 = vmatprep.subr.bf16.mxu0 0
      %795 = vmatpush1.bf16.msra.mxu0 0
      %796 = vmatprep.subr.bf16.mxu0 0
      %797 = vmatpush1.bf16.msra.mxu0 0
      %798 = vmatprep.subr.bf16.mxu0 0
      %799 = vmatpush1.bf16.msra.mxu0 0
      %800 = vmatprep.mubr.bf16.mxu0 0
      %801 = vmatmul.mubr.bf16.gmra.mrb[0].mxu0 %v760
      %v802 = vpop.f32.mrb[0].mxu0
      %v803 = vadd.f32 0.0, %v802
      %v804 = vpop.f32.mrb[0].mxu0
      %v805 = vadd.f32 0.0, %v804
      %v806 = vpop.f32.mrb[0].mxu0
      %v807 = vpop.f32.mrb[0].mxu0
      %808 = vdwg.mxu0
      %v809 = vadd.f32 %v746, %v803
      %v810 = vadd.f32 %v747, %v805
      %s811 = scalar_lea.vmem %s2, 28
      %v812 = vld [vmem:[%s811] sm:$0xf]
      %813 = vrot.lane.b32.xlu0 %v376, 91
      %v814 = vpop.permute.xlu0 %813
      %815 = vrot.lane.b32.xlu0 %v377, 91
      %v816 = vpop.permute.xlu0 %815
      %817 = vrot.lane.b32.xlu0 %v378, 91
      %v818 = vpop.permute.xlu0 %817
      %vm819 = vcmask 744448
      %v820 = vsel %vm819, %v814, %v816
      %v821 = vsel %vm819, %v816, %v818
      %v823 = vsel %vm394, %v812, 0
      %v826 = vsel %vm398, %v820, 0
      %v829 = vsel %vm398, %v821, 0
      %831 = vmatprep.subr.bf16.mxu0 %v829
      %832 = vmatpush1.bf16.msra.mxu0 %v826
      %833 = vmatprep.subr.bf16.mxu0 0
      %834 = vmatpush1.bf16.msra.mxu0 0
      %835 = vmatprep.subr.bf16.mxu0 0
      %836 = vmatpush1.bf16.msra.mxu0 0
      %837 = vmatprep.subr.bf16.mxu0 0
      %838 = vmatpush1.bf16.msra.mxu0 0
      %839 = vmatprep.subr.bf16.mxu0 0
      %840 = vmatpush1.bf16.msra.mxu0 0
      %841 = vmatprep.subr.bf16.mxu0 0
      %842 = vmatpush1.bf16.msra.mxu0 0
      %843 = vmatprep.subr.bf16.mxu0 0
      %844 = vmatpush1.bf16.msra.mxu0 0
      %845 = vmatprep.subr.bf16.mxu0 0
      %846 = vmatpush1.bf16.msra.mxu0 0
      %847 = vmatprep.subr.bf16.mxu0 0
      %848 = vmatpush1.bf16.msra.mxu0 0
      %849 = vmatprep.subr.bf16.mxu0 0
      %850 = vmatpush1.bf16.msra.mxu0 0
      %851 = vmatprep.subr.bf16.mxu0 0
      %852 = vmatpush1.bf16.msra.mxu0 0
      %853 = vmatprep.subr.bf16.mxu0 0
      %854 = vmatpush1.bf16.msra.mxu0 0
      %855 = vmatprep.subr.bf16.mxu0 0
      %856 = vmatpush1.bf16.msra.mxu0 0
      %857 = vmatprep.subr.bf16.mxu0 0
      %858 = vmatpush1.bf16.msra.mxu0 0
      %859 = vmatprep.subr.bf16.mxu0 0
      %860 = vmatpush1.bf16.msra.mxu0 0
      %861 = vmatprep.subr.bf16.mxu0 0
      %862 = vmatpush1.bf16.msra.mxu0 0
      %863 = vmatprep.mubr.bf16.mxu0 0
      %864 = vmatmul.mubr.bf16.gmra.mrb[0].mxu0 %v823
      %v865 = vpop.f32.mrb[0].mxu0
      %v866 = vadd.f32 0.0, %v865
      %v867 = vpop.f32.mrb[0].mxu0
      %v868 = vadd.f32 0.0, %v867
      %v869 = vpop.f32.mrb[0].mxu0
      %v870 = vpop.f32.mrb[0].mxu0
      %871 = vdwg.mxu0
      %v872 = vadd.f32 %v809, %v866
      %v873 = vadd.f32 %v810, %v868
      %s874 = scalar_lea.vmem %s2, 32
      %v875 = vld [vmem:[%s874] sm:$0xf]
      %876 = vrot.lane.b32.xlu0 %v376, 90
      %v877 = vpop.permute.xlu0 %876
      %878 = vrot.lane.b32.xlu0 %v377, 90
      %v879 = vpop.permute.xlu0 %878
      %880 = vrot.lane.b32.xlu0 %v378, 90
      %v881 = vpop.permute.xlu0 %880
      %vm882 = vcmask 736256
      %v883 = vsel %vm882, %v877, %v879
      %v884 = vsel %vm882, %v879, %v881
      %v886 = vsel %vm394, %v875, 0
      %v889 = vsel %vm398, %v883, 0
      %v892 = vsel %vm398, %v884, 0
      %894 = vmatprep.subr.bf16.mxu0 %v892
      %895 = vmatpush1.bf16.msra.mxu0 %v889
      %896 = vmatprep.subr.bf16.mxu0 0
      %897 = vmatpush1.bf16.msra.mxu0 0
      %898 = vmatprep.subr.bf16.mxu0 0
      %899 = vmatpush1.bf16.msra.mxu0 0
      %900 = vmatprep.subr.bf16.mxu0 0
      %901 = vmatpush1.bf16.msra.mxu0 0
      %902 = vmatprep.subr.bf16.mxu0 0
      %903 = vmatpush1.bf16.msra.mxu0 0
      %904 = vmatprep.subr.bf16.mxu0 0
      %905 = vmatpush1.bf16.msra.mxu0 0
      %906 = vmatprep.subr.bf16.mxu0 0
      %907 = vmatpush1.bf16.msra.mxu0 0
      %908 = vmatprep.subr.bf16.mxu0 0
      %909 = vmatpush1.bf16.msra.mxu0 0
      %910 = vmatprep.subr.bf16.mxu0 0
      %911 = vmatpush1.bf16.msra.mxu0 0
      %912 = vmatprep.subr.bf16.mxu0 0
      %913 = vmatpush1.bf16.msra.mxu0 0
      %914 = vmatprep.subr.bf16.mxu0 0
      %915 = vmatpush1.bf16.msra.mxu0 0
      %916 = vmatprep.subr.bf16.mxu0 0
      %917 = vmatpush1.bf16.msra.mxu0 0
      %918 = vmatprep.subr.bf16.mxu0 0
      %919 = vmatpush1.bf16.msra.mxu0 0
      %920 = vmatprep.subr.bf16.mxu0 0
      %921 = vmatpush1.bf16.msra.mxu0 0
      %922 = vmatprep.subr.bf16.mxu0 0
      %923 = vmatpush1.bf16.msra.mxu0 0
      %924 = vmatprep.subr.bf16.mxu0 0
      %925 = vmatpush1.bf16.msra.mxu0 0
      %926 = vmatprep.mubr.bf16.mxu0 0
      %927 = vmatmul.mubr.bf16.gmra.mrb[0].mxu0 %v886
      %v928 = vpop.f32.mrb[0].mxu0
      %v929 = vadd.f32 0.0, %v928
      %v930 = vpop.f32.mrb[0].mxu0
      %v931 = vadd.f32 0.0, %v930
      %v932 = vpop.f32.mrb[0].mxu0
      %v933 = vpop.f32.mrb[0].mxu0
      %934 = vdwg.mxu0
      %v935 = vadd.f32 %v872, %v929
      %v936 = vadd.f32 %v873, %v931
      %v937 = vld [vmem:[%s211] sm:$0xff]
      %939 = vset.pattern.permute.xlu0 0
      %940 = vperm.xlu0 %939, %v937
      %v941 = vpop.permute.xlu0 %940
      %v943 = vmul.f32 %v935, %v941
      %v944 = vmul.f32 %v936, %v941
      %945 = vst [vmem:[%s222] sm:$0xff] %v943
      %946 = vst [vmem:[%s222 + $0x8] sm:$0xff] %v944
      %s947 = smul.u32 %s21, 2
      %s948 = sadd.s32 %s947, %s22
      %s949 = smul.u32 2, %s948
      %p950 = scmp.lt.s32.totalorder %s20, 1
      %s951 = scalar_select %p950, %s20, 1
      %p952 = scmp.lt.s32.totalorder %s949, 3
      %s953 = scalar_select %p952, %s949, 3
      %s954 = smul.addr %s951, 4
      %s955 = sadd.s32 %s953, %s954
      %s956 = smul.addr %s955, 8
      %s957 = scalar_lea.vmem %s4, %s956
      // Predicated region
      $region101: #{modulated_conv2d.1} parent=31 // pred_check
        %p958 = pneg %p131
      $region102: #{modulated_conv2d.1} parent=31 // pred_check_branch
        %960 = sbr.rel (%p958) target = $region104
      $region103: #{modulated_conv2d.1} parent=31 // pred_region
        %s961 = smul.u32 %s21, 2
        %s962 = sadd.s32 %s961, %s22
        %s963 = smul.u32 2, %s962
      $region104: #{modulated_conv2d.1} parent=31 // pred_fallthru
        _
    $region32: #{modulated_conv2d.1} parent=5 // pred_fallthru
      _
    %p964 = scmp.le.s32.totalorder 2, %s10
    // Predicated region
    $region105: #{modulated_conv2d.1} parent=5 // pred_check
      %p965 = pneg %p964
    $region106: #{modulated_conv2d.1} parent=5 // pred_check_branch
      %967 = sbr.rel (%p965) target = $region108
    $region107: #{modulated_conv2d.1} parent=5 // pred_region
      %s968 = ssub.s32 %s10, 2
      // Predicated region
      $region109: #{modulated_conv2d.1} parent=107 // pred_check
        %p969 = pneg %p137
      $region110: #{modulated_conv2d.1} parent=107 // pred_check_branch
        %971 = sbr.rel (%p969) target = $region112
      $region111: #{modulated_conv2d.1} parent=107 // pred_region
        %s972 = smul.u32 %s24, 2
        %s973 = sadd.s32 %s972, %s25
        %s974 = smul.u32 2, %s973
        %p975 = scmp.lt.s32.totalorder %s23, 1
        %s976 = scalar_select %p975, %s23, 1
        %p977 = scmp.lt.s32.totalorder %s974, 3
        %s978 = scalar_select %p977, %s974, 3
        %s979 = smul.addr %s976, 4
        %s980 = sadd.s32 %s978, %s979
        %s981 = smul.addr %s980, 8
        %s982 = scalar_lea.vmem %s4, %s981
      $region112: #{modulated_conv2d.1} parent=107 // pred_fallthru
        _
    $region108: #{modulated_conv2d.1} parent=5 // pred_fallthru
      _
  $region6: #{modulated_conv2d.1} parent=0 // loop_footer
    %s14 = sadd.s32 1, %s10
  $region7: #{modulated_conv2d.1} parent=0 // loop_footer_branch
    %9 = sbr.rel target = $region3
  $region8: #{modulated_conv2d.1} parent=0 // loop_exit
    _
  %983 = vsyncmov [#allocation3]
  %s984 = vpop.sfrf %983
  %p985 = scmp.eq.s32.totalorder %s984, 0
  %p986 = pneg %p985
  %988 = shalt.err (%p986)
  %s989 = scalar_lea.sflag [#allocation3], 1
  %990 = vsyncmov %s989
  %s991 = vpop.sfrf %990
  %p992 = scmp.eq.s32.totalorder %s991, 0
  %p993 = pneg %p992
  %995 = shalt.err (%p993)

</llo_original>
